<compile_context>
chip_gen: v5e
topology: v5e:2x2
jax: 0.10.0
libtpu: 0.0.40
codegen_flags: <defaults>
</compile_context>

<pallas_src>
import jax
import jax.numpy as jnp
from jax.experimental import pallas as pl
from jax.experimental.pallas import tpu as pltpu


def _round_up(n, m):
    return ((n + m - 1) // m) * m


def svd_dot_kernel(u_ref, i_ref, b_ref, o_ref):
    """Per-row dot of user/item embeddings plus combined bias.

    u_ref, i_ref : (tb, F)    VMEM tiles of gathered embeddings
    b_ref        : (1, 1, tb) lane-dense combined bias tile (u_bias + i_bias)
    o_ref        : (1, 1, tb) lane-dense output tile
    """
    prod = u_ref[...] * i_ref[...]          # VPU elementwise, f32
    dot = jnp.sum(prod, axis=1)             # lane reduce -> (tb,)
    out = dot + b_ref[0, 0, :]
    o_ref[...] = out.reshape(1, 1, out.shape[0])


def svd_forward(params, x, *, tile_b=1024):
    """Pallas implementation of Net.forward (inference / eval mode)."""
    user_id = x[:, 0].astype(jnp.int32)
    item_id = x[:, 1].astype(jnp.int32)

    # Gather (glue). embedding_dropout / hidden_dropout are identity at eval.
    u_emb = jnp.take(params["u_embeddings"], user_id, axis=0)       # [B, F]
    i_emb = jnp.take(params["i_embeddings"], item_id, axis=0)       # [B, F]
    bias = (jnp.take(params["u_biases"], user_id, axis=0)
            + jnp.take(params["i_biases"], item_id, axis=0))[:, 0]  # [B]

    B, F = u_emb.shape

    # ---- choose batch tile ---------------------------------------------------
    tb = min(int(tile_b), _round_up(B, 8))
    tb = max(8, _round_up(tb, 8))                       # sublane multiple of 8
    # VMEM budget: 2 embedding inputs x double-buffered (tb, F) f32 tiles.
    # Stay well under the 32 MiB default scoped VMEM (v7x physical is 64 MiB).
    budget_bytes = 24 * 1024 * 1024
    bytes_per_row = 2 * 2 * F * 4
    max_tb = max(8, (budget_bytes // bytes_per_row) // 8 * 8)
    tb = min(tb, max_tb)
    # v7x megacore: prefer >= 2 grid steps so both TensorCores get work.
    if B > 256 and pl.cdiv(B, tb) < 2:
        tb = _round_up(pl.cdiv(B, 2), 8)

    num_tiles = pl.cdiv(B, tb)
    B_pad = num_tiles * tb
    if B_pad != B:
        pad = B_pad - B
        u_emb = jnp.pad(u_emb, ((0, pad), (0, 0)))
        i_emb = jnp.pad(i_emb, ((0, pad), (0, 0)))
        bias = jnp.pad(bias, (0, pad))
    bias_tiles = bias.reshape(num_tiles, 1, tb)

    out_tiles = pl.pallas_call(
        svd_dot_kernel,
        out_shape=jax.ShapeDtypeStruct((num_tiles, 1, tb), jnp.float32),
        grid_spec=pltpu.PrefetchScalarGridSpec(
            num_scalar_prefetch=0,
            grid=(num_tiles,),
            in_specs=[
                pl.BlockSpec((tb, F), lambda b: (b, 0)),
                pl.BlockSpec((tb, F), lambda b: (b, 0)),
                pl.BlockSpec((1, 1, tb), lambda b: (b, 0, 0)),
            ],
            out_specs=pl.BlockSpec((1, 1, tb), lambda b: (b, 0, 0)),
        ),
        compiler_params=pltpu.CompilerParams(
            dimension_semantics=("parallel",)),
    )(u_emb, i_emb, bias_tiles)

    return out_tiles.reshape(B_pad, 1)[:B]


def init_params(key, n_users, n_items, n_features):
    """Deterministic synthetic parameters matching the module's __init__ shapes."""
    k1, k2, k3, k4 = jax.random.split(key, 4)
    return {
        "u_embeddings": jax.random.normal(k1, (n_users, n_features), jnp.float32) * 0.1,
        "i_embeddings": jax.random.normal(k2, (n_items, n_features), jnp.float32) * 0.1,
        "u_biases":     jax.random.normal(k3, (n_users, 1), jnp.float32) * 0.1,
        "i_biases":     jax.random.normal(k4, (n_items, 1), jnp.float32) * 0.1,
    }
    # TODO(synk): i_time_biases / u_linears / i_linears / linears / last_layer
    # are dead code after the early return in forward(), so not materialized.


def reference_forward(params, x):
    """Pure-JAX reference of the PyTorch forward (eval mode)."""
    user_id = x[:, 0].astype(jnp.int32)
    item_id = x[:, 1].astype(jnp.int32)
    u = params["u_embeddings"][user_id]
    i = params["i_embeddings"][item_id]
    ub = params["u_biases"][user_id]
    ib = params["i_biases"][item_id]
    return (u * i).sum(axis=1).reshape(-1, 1) + ub + ib


if __name__ == "__main__":
    key = jax.random.PRNGKey(0)
    n_users, n_items = 50, 60
    n_features = 96           # small stand-in for the default n_features=100
    batch = 300               # non-multiple of the tile -> exercises padding path

    pkey, xkey = jax.random.split(key)
    params = init_params(pkey, n_users, n_items, n_features)

    ku, ki, kt = jax.random.split(xkey, 3)
    x = jnp.stack(
        [
            jax.random.randint(ku, (batch,), 0, n_users),
            jax.random.randint(ki, (batch,), 0, n_items),
            jax.random.randint(kt, (batch,), 0, 50),
        ],
        axis=1,
    ).astype(jnp.int32)        # [B, 3]

    ref = reference_forward(params, x)

    out = jax.block_until_ready(svd_forward(params, x))              # default (large) tile
    assert out.shape == (batch, 1)
    assert jnp.allclose(out, ref, atol=1e-5, rtol=1e-5)

    out_multi = jax.block_until_ready(svd_forward(params, x, tile_b=64))  # multi-step grid
    assert jnp.allclose(out_multi, ref, atol=1e-5, rtol=1e-5)

    print("KERNEL_OK")
</pallas_src>

<mosaic_0001>
module attributes {stable_mosaic.version = 11 : i64} {
  func.func @svd_dot_kernel(%arg0: i32, %arg1: memref<152x96xf32, #tpu.memory_space<vmem>>, %arg2: memref<152x96xf32, #tpu.memory_space<vmem>>, %arg3: memref<1x1x152xf32, #tpu.memory_space<vmem>>, %arg4: memref<1x1x152xf32, #tpu.memory_space<vmem>>) attributes {dimension_semantics = [#tpu.dimension_semantics<parallel>], iteration_bounds = array<i64: 2>, scalar_prefetch = 0 : i64, scratch_operands = 0 : i64, tpu.core_type = #tpu.core_type<tc>, window_params = [{transform_indices = @transform_0, window_bounds = array<i64: 152, 96>}, {transform_indices = @transform_1, window_bounds = array<i64: 152, 96>}, {transform_indices = @transform_2, window_bounds = array<i64: 1, 1, 152>}, {transform_indices = @transform_3, window_bounds = array<i64: 1, 1, 152>}]} {
    %c0 = arith.constant 0 : index
    %c0_0 = arith.constant 0 : index
    %0 = vector.load %arg1[%c0, %c0_0] : memref<152x96xf32, #tpu.memory_space<vmem>>, vector<152x96xf32>
    %c0_1 = arith.constant 0 : index
    %c0_2 = arith.constant 0 : index
    %1 = vector.load %arg2[%c0_1, %c0_2] : memref<152x96xf32, #tpu.memory_space<vmem>>, vector<152x96xf32>
    %2 = arith.mulf %0, %1 : vector<152x96xf32>
    %cst = arith.constant dense<0.000000e+00> : vector<152xf32>
    %3 = vector.multi_reduction <add>, %2, %cst [1] : vector<152x96xf32> to vector<152xf32>
    %c0_3 = arith.constant 0 : index
    %c0_4 = arith.constant 0 : index
    %c0_5 = arith.constant 0 : index
    %4 = vector.load %arg3[%c0_3, %c0_4, %c0_5] : memref<1x1x152xf32, #tpu.memory_space<vmem>>, vector<1x1x152xf32>
    %5 = vector.shape_cast %4 : vector<1x1x152xf32> to vector<152xf32>
    %6 = arith.addf %3, %5 : vector<152xf32>
    %7 = vector.shape_cast %6 : vector<152xf32> to vector<1x1x152xf32>
    %c0_6 = arith.constant 0 : index
    %c0_7 = arith.constant 0 : index
    %c0_8 = arith.constant 0 : index
    %8 = vector.load %arg4[%c0_6, %c0_7, %c0_8] : memref<1x1x152xf32, #tpu.memory_space<vmem>>, vector<1x1x152xf32>
    tpu.vector_store %arg4[%c0_6, %c0_7, %c0_8], %7 {strides = array<i32>} : memref<1x1x152xf32, #tpu.memory_space<vmem>>, vector<1x1x152xf32>,
    return
  }
  func.func @transform_0(%arg0: i32) -> (i32, i32) {
    %c0_i32 = arith.constant 0 : i32
    %c0_i32_0 = arith.constant 0 : i32
    return %arg0, %c0_i32 : i32, i32
  }
  func.func @transform_1(%arg0: i32) -> (i32, i32) {
    %c0_i32 = arith.constant 0 : i32
    %c0_i32_0 = arith.constant 0 : i32
    return %arg0, %c0_i32 : i32, i32
  }
  func.func @transform_2(%arg0: i32) -> (i32, i32, i32) {
    %c0_i32 = arith.constant 0 : i32
    %c0_i32_0 = arith.constant 0 : i32
    %c0_i32_1 = arith.constant 0 : i32
    return %arg0, %c0_i32, %c0_i32_0 : i32, i32, i32
  }
  func.func @transform_3(%arg0: i32) -> (i32, i32, i32) {
    %c0_i32 = arith.constant 0 : i32
    %c0_i32_0 = arith.constant 0 : i32
    %c0_i32_1 = arith.constant 0 : i32
    return %arg0, %c0_i32, %c0_i32_0 : i32, i32, i32
  }
}

</mosaic_0001>

<llo_original>
// kernel: tpu_custom_call.1
$region0: #{tpu_custom_call.1}
  #allocation0 [shape = 'u32[]', space=smem, size = 0x4, offset = 0x4, fixed_abs, tag = 'smem constant byte address 0x4 - core index']
  #allocation1 [shape = 'u32[72,128]{1,0:T(1,128)}', space=vmem, size = 0x9000, scoped, tag = 'internal scratch']
  %s0 = inlined_call_operand.vmem [shape: f32[304,96], index: 0, kind: input, shape index: {}]
  %s1 = inlined_call_operand.vmem [shape: f32[304,96], index: 1, kind: input, shape index: {}]
  %s2 = inlined_call_operand.vmem [shape: f32[2,1,152], index: 2, kind: input, shape index: {}]
  %s3 = inlined_call_operand.hbm [shape: f32[2,1,152], index: 3, kind: output, shape index: {}]
  %s4 = sld [smem:[#allocation0]]
  $region45: #{tpu_custom_call.1} parent=0
    _
  %s6 = ssub.s32 1, %s4
  %s7 = scalar_select 0, %s6, %s4
  $region1: #{tpu_custom_call.1} parent=0
    #allocation2 [shape = 'u8[2048]{0}', space=vmem, size = 0x800, scoped, tag = 'output window, operand 0']
    #allocation3 [shape = 's32[2]{0}', space=sflag, size = 0x8, scoped, tag = 'scoped memory for tpu_custom_call.1']
    %8 = vsyncpa [#allocation3], 0
    %s9 = scalar_lea.sflag [#allocation3], 1
    %10 = vsyncpa %s9, 0
    loop: start=0, step=1, limit=4
    $region2: #{tpu_custom_call.1} parent=1 // loop_pre_header
      _
    $region3: #{tpu_custom_call.1} parent=1 // loop_header
      %s12 = sphi 0, %s16
      %p13 = scmp.ge.s32.totalorder %s12, 4
      %s22 = sphi 0, %s24
      %s25 = sphi 0, %s22
      %s26 = sphi 0, %s25
      %s42 = sphi 0, %s26
      %s48 = sphi 0, %s50
      %s51 = sphi 0, %s48
      %s52 = sphi 0, %s51
      %s68 = sphi 0, %s52
      %s74 = sphi 0, %s76
      %s77 = sphi 0, %s74
      %s78 = sphi 0, %s77
      %s94 = sphi 0, %s78
      %s100 = sphi 0, %s102
      %s103 = sphi 0, %s100
      %s104 = sphi 0, %s103
      %s120 = sphi 0, %s104
    $region4: #{tpu_custom_call.1} parent=1 // loop_header_branch
      %15 = sbr.rel (%p13) target = $region8
    $region5: #{tpu_custom_call.1} parent=1 // loop_body
      %s17 = ssub.s32 %s12, 1
      %s18 = ssub.s32 %s12, 2
      %s19 = sadd.s32 %s12, 1
      %s20 = ssub.s32 %s12, %s19
      %p21 = scmp.eq.s32.totalorder %s20, 0
      %s23 = sadd.s32 %s22, 1
      %s24 = scalar_select %p21, %s22, %s23
      %p27 = pneg %p21
      %p28 = scmp.eq.s32.totalorder %s12, 1
      %p29 = por %p27, %p28
      %p30 = scmp.ne.s32.totalorder %s22, %s25
      %p31 = scmp.eq.s32.totalorder %s12, 0
      %p32 = por %p30, %p31
      %p33 = scmp.ne.s32.totalorder %s22, %s25
      %p34 = scmp.eq.s32.totalorder %s17, 1
      %p35 = por %p33, %p34
      %p36 = scmp.ne.s32.totalorder %s25, %s26
      %p37 = scmp.eq.s32.totalorder %s17, 0
      %p38 = por %p36, %p37
      %p39 = scmp.ne.s32.totalorder %s25, %s26
      %p40 = scmp.eq.s32.totalorder %s18, 1
      %p41 = por %p39, %p40
      %p43 = scmp.ne.s32.totalorder %s26, %s42
      %p44 = scmp.eq.s32.totalorder %s18, 0
      %p45 = por %p43, %p44
      %s46 = ssub.s32 %s12, %s19
      %p47 = scmp.eq.s32.totalorder %s46, 0
      %s49 = sadd.s32 %s48, 1
      %s50 = scalar_select %p47, %s48, %s49
      %p53 = pneg %p47
      %p54 = scmp.eq.s32.totalorder %s12, 1
      %p55 = por %p53, %p54
      %p56 = scmp.ne.s32.totalorder %s48, %s51
      %p57 = scmp.eq.s32.totalorder %s12, 0
      %p58 = por %p56, %p57
      %p59 = scmp.ne.s32.totalorder %s48, %s51
      %p60 = scmp.eq.s32.totalorder %s17, 1
      %p61 = por %p59, %p60
      %p62 = scmp.ne.s32.totalorder %s51, %s52
      %p63 = scmp.eq.s32.totalorder %s17, 0
      %p64 = por %p62, %p63
      %p65 = scmp.ne.s32.totalorder %s51, %s52
      %p66 = scmp.eq.s32.totalorder %s18, 1
      %p67 = por %p65, %p66
      %p69 = scmp.ne.s32.totalorder %s52, %s68
      %p70 = scmp.eq.s32.totalorder %s18, 0
      %p71 = por %p69, %p70
      %s72 = ssub.s32 %s12, %s19
      %p73 = scmp.eq.s32.totalorder %s72, 0
      %s75 = sadd.s32 %s74, 1
      %s76 = scalar_select %p73, %s74, %s75
      %p79 = pneg %p73
      %p80 = scmp.eq.s32.totalorder %s12, 1
      %p81 = por %p79, %p80
      %p82 = scmp.ne.s32.totalorder %s74, %s77
      %p83 = scmp.eq.s32.totalorder %s12, 0
      %p84 = por %p82, %p83
      %p85 = scmp.ne.s32.totalorder %s74, %s77
      %p86 = scmp.eq.s32.totalorder %s17, 1
      %p87 = por %p85, %p86
      %p88 = scmp.ne.s32.totalorder %s77, %s78
      %p89 = scmp.eq.s32.totalorder %s17, 0
      %p90 = por %p88, %p89
      %p91 = scmp.ne.s32.totalorder %s77, %s78
      %p92 = scmp.eq.s32.totalorder %s18, 1
      %p93 = por %p91, %p92
      %p95 = scmp.ne.s32.totalorder %s78, %s94
      %p96 = scmp.eq.s32.totalorder %s18, 0
      %p97 = por %p95, %p96
      %s98 = ssub.s32 %s12, %s19
      %p99 = scmp.eq.s32.totalorder %s98, 0
      %s101 = sadd.s32 %s100, 1
      %s102 = scalar_select %p99, %s100, %s101
      %p105 = pneg %p99
      %p106 = scmp.eq.s32.totalorder %s12, 1
      %p107 = por %p105, %p106
      %p108 = scmp.ne.s32.totalorder %s100, %s103
      %p109 = scmp.eq.s32.totalorder %s12, 0
      %p110 = por %p108, %p109
      %p111 = scmp.ne.s32.totalorder %s100, %s103
      %p112 = scmp.eq.s32.totalorder %s17, 1
      %p113 = por %p111, %p112
      %p114 = scmp.ne.s32.totalorder %s103, %s104
      %p115 = scmp.eq.s32.totalorder %s17, 0
      %p116 = por %p114, %p115
      %p117 = scmp.ne.s32.totalorder %s103, %s104
      %p118 = scmp.eq.s32.totalorder %s18, 1
      %p119 = por %p117, %p118
      %p121 = scmp.ne.s32.totalorder %s104, %s120
      %p122 = scmp.eq.s32.totalorder %s18, 0
      %p123 = por %p121, %p122
      %p124 = scmp.le.s32.totalorder 1, %s12
      %p125 = scmp.lt.s32.totalorder %s12, 3
      %p126 = pnand %p124, %p125
      %p127 = pneg %p126
      // Predicated region
      $region9: #{tpu_custom_call.1} parent=5 // pred_check
        _
      $region10: #{tpu_custom_call.1} parent=5 // pred_check_branch
        %129 = sbr.rel (%p126) target = $region12
      $region11: #{tpu_custom_call.1} parent=5 // pred_region
        %s130 = ssub.s32 %s12, 1
      $region12: #{tpu_custom_call.1} parent=5 // pred_fallthru
        _
      %p131 = scmp.lt.s32.totalorder %s12, 2
      // Predicated region
      $region13: #{tpu_custom_call.1} parent=5 // pred_check
        %p132 = pneg %p131
      $region14: #{tpu_custom_call.1} parent=5 // pred_check_branch
        %134 = sbr.rel (%p132) target = $region16
      $region15: #{tpu_custom_call.1} parent=5 // pred_region
        // Predicated region
        $region17: #{tpu_custom_call.1} parent=15 // pred_check
          %p135 = pneg %p32
        $region18: #{tpu_custom_call.1} parent=15 // pred_check_branch
          %137 = sbr.rel (%p135) target = $region20
        $region19: #{tpu_custom_call.1} parent=15 // pred_region
          %s138 = smul.u32 19, %s12
          %p139 = scmp.lt.s32.totalorder %s138, 37
          %s140 = scalar_select %p139, %s138, 37
          %s141 = smul.addr %s140, 8
          %s142 = scalar_lea.vmem %s0, %s141
          %s143 = smul.u32 19, %s12
        $region20: #{tpu_custom_call.1} parent=15 // pred_fallthru
          _
        // Predicated region
        $region21: #{tpu_custom_call.1} parent=15 // pred_check
          %p144 = pneg %p58
        $region22: #{tpu_custom_call.1} parent=15 // pred_check_branch
          %146 = sbr.rel (%p144) target = $region24
        $region23: #{tpu_custom_call.1} parent=15 // pred_region
          %s147 = smul.u32 19, %s12
          %p148 = scmp.lt.s32.totalorder %s147, 37
          %s149 = scalar_select %p148, %s147, 37
          %s150 = smul.addr %s149, 8
          %s151 = scalar_lea.vmem %s1, %s150
          %s152 = smul.u32 19, %s12
        $region24: #{tpu_custom_call.1} parent=15 // pred_fallthru
          _
        // Predicated region
        $region25: #{tpu_custom_call.1} parent=15 // pred_check
          %p153 = pneg %p84
        $region26: #{tpu_custom_call.1} parent=15 // pred_check_branch
          %155 = sbr.rel (%p153) target = $region28
        $region27: #{tpu_custom_call.1} parent=15 // pred_region
          %p156 = scmp.lt.s32.totalorder %s12, 1
          %s157 = scalar_select %p156, %s12, 1
          %s158 = smul.addr %s157, 2
          %s159 = scalar_lea.vmem %s2, %s158
        $region28: #{tpu_custom_call.1} parent=15 // pred_fallthru
          _
      $region16: #{tpu_custom_call.1} parent=5 // pred_fallthru
        _
      %p160 = scmp.le.s32.totalorder 1, %s12
      %p161 = scmp.lt.s32.totalorder %s12, 3
      %p162 = pnand %p160, %p161
      %p163 = pneg %p162
      // Predicated region
      $region29: #{tpu_custom_call.1} parent=5 // pred_check
        _
      $region30: #{tpu_custom_call.1} parent=5 // pred_check_branch
        %165 = sbr.rel (%p162) target = $region32
      $region31: #{tpu_custom_call.1} parent=5 // pred_region
        %s166 = ssub.s32 %s12, 1
        %s167 = smul.u32 19, %s17
        %p168 = scmp.lt.s32.totalorder %s167, 37
        %s169 = scalar_select %p168, %s167, 37
        %s170 = smul.addr %s169, 8
        %s171 = scalar_lea.vmem %s0, %s170
        %p172 = pneg %p38
        %p173 = pneg %p35
        %s174 = smul.u32 19, %s17
        %p175 = scmp.lt.s32.totalorder %s174, 37
        %s176 = scalar_select %p175, %s174, 37
        %s177 = smul.addr %s176, 8
        %s178 = scalar_lea.vmem %s1, %s177
        %p179 = pneg %p64
        %p180 = pneg %p61
        %p181 = scmp.lt.s32.totalorder %s17, 1
        %s182 = scalar_select %p181, %s17, 1
        %s183 = smul.addr %s182, 2
        %s184 = scalar_lea.vmem %s2, %s183
        %p185 = pneg %p90
        %p186 = pneg %p87
        %p187 = pneg %p116
        %p188 = pneg %p113
        %s189 = sand.u32 %s103, 1
        %s190 = scalar_lea.sflag [#allocation3], %s189
        %s191 = sand.u32 %s103, 1
        %s192 = smul.addr %s191, 2
        %s193 = scalar_lea.vmem [#allocation2], %s192
        %s194 = smul.u32 19, %s17
        %p195 = scmp.lt.s32.totalorder %s194, 37
        %s196 = scalar_select %p195, %s194, 37
        %s197 = smul.addr %s196, 8
        %s198 = scalar_lea.vmem %s0, %s197
        %s199 = smul.u32 19, %s17
        %s200 = smul.u32 19, %s17
        %p201 = scmp.lt.s32.totalorder %s200, 37
        %s202 = scalar_select %p201, %s200, 37
        %s203 = smul.addr %s202, 8
        %s204 = scalar_lea.vmem %s1, %s203
        %s205 = smul.u32 19, %s17
        %p206 = scmp.lt.s32.totalorder %s17, 1
        %s207 = scalar_select %p206, %s17, 1
        %s208 = smul.addr %s207, 2
        %s209 = scalar_lea.vmem %s2, %s208
        %v210 = vld [vmem:[%s198] sm:$0xff]
        %v211 = vld [vmem:[%s198 + $0x8] sm:$0xff]
        %v212 = vld [vmem:[%s198 + $0x10] sm:$0xff]
        %v213 = vld [vmem:[%s198 + $0x18] sm:$0xff]
        %v214 = vld [vmem:[%s198 + $0x20] sm:$0xff]
        %v215 = vld [vmem:[%s198 + $0x28] sm:$0xff]
        %v216 = vld [vmem:[%s198 + $0x30] sm:$0xff]
        %v217 = vld [vmem:[%s198 + $0x38] sm:$0xff]
        %v218 = vld [vmem:[%s198 + $0x40] sm:$0xff]
        %v219 = vld [vmem:[%s198 + $0x48] sm:$0xff]
        %v220 = vld [vmem:[%s198 + $0x50] sm:$0xff]
        %v221 = vld [vmem:[%s198 + $0x58] sm:$0xff]
        %v222 = vld [vmem:[%s198 + $0x60] sm:$0xff]
        %v223 = vld [vmem:[%s198 + $0x68] sm:$0xff]
        %v224 = vld [vmem:[%s198 + $0x70] sm:$0xff]
        %v225 = vld [vmem:[%s198 + $0x78] sm:$0xff]
        %v226 = vld [vmem:[%s198 + $0x80] sm:$0xff]
        %v227 = vld [vmem:[%s198 + $0x88] sm:$0xff]
        %v228 = vld [vmem:[%s198 + $0x90] sm:$0xff]
        %v229 = vld [vmem:[%s204] sm:$0xff]
        %v230 = vld [vmem:[%s204 + $0x8] sm:$0xff]
        %v231 = vld [vmem:[%s204 + $0x10] sm:$0xff]
        %v232 = vld [vmem:[%s204 + $0x18] sm:$0xff]
        %v233 = vld [vmem:[%s204 + $0x20] sm:$0xff]
        %v234 = vld [vmem:[%s204 + $0x28] sm:$0xff]
        %v235 = vld [vmem:[%s204 + $0x30] sm:$0xff]
        %v236 = vld [vmem:[%s204 + $0x38] sm:$0xff]
        %v237 = vld [vmem:[%s204 + $0x40] sm:$0xff]
        %v238 = vld [vmem:[%s204 + $0x48] sm:$0xff]
        %v239 = vld [vmem:[%s204 + $0x50] sm:$0xff]
        %v240 = vld [vmem:[%s204 + $0x58] sm:$0xff]
        %v241 = vld [vmem:[%s204 + $0x60] sm:$0xff]
        %v242 = vld [vmem:[%s204 + $0x68] sm:$0xff]
        %v243 = vld [vmem:[%s204 + $0x70] sm:$0xff]
        %v244 = vld [vmem:[%s204 + $0x78] sm:$0xff]
        %v245 = vld [vmem:[%s204 + $0x80] sm:$0xff]
        %v246 = vld [vmem:[%s204 + $0x88] sm:$0xff]
        %v247 = vld [vmem:[%s204 + $0x90] sm:$0xff]
        %v248 = vmul.f32 %v210, %v229
        %v249 = vmul.f32 %v211, %v230
        %v250 = vmul.f32 %v212, %v231
        %v251 = vmul.f32 %v213, %v232
        %v252 = vmul.f32 %v214, %v233
        %v253 = vmul.f32 %v215, %v234
        %v254 = vmul.f32 %v216, %v235
        %v255 = vmul.f32 %v217, %v236
        %v256 = vmul.f32 %v218, %v237
        %v257 = vmul.f32 %v219, %v238
        %v258 = vmul.f32 %v220, %v239
        %v259 = vmul.f32 %v221, %v240
        %v260 = vmul.f32 %v222, %v241
        %v261 = vmul.f32 %v223, %v242
        %v262 = vmul.f32 %v224, %v243
        %v263 = vmul.f32 %v225, %v244
        %v264 = vmul.f32 %v226, %v245
        %v265 = vmul.f32 %v227, %v246
        %v266 = vmul.f32 %v228, %v247
        %vm267 = vcmask 785408
        %v268 = vsel %vm267, %v248, 0.0
        %269 = vadd.xlane.f32.xlu0 %v268
        %v270 = vpop.xlane.xlu0 %269
        %v271 = vsel %vm267, %v249, 0.0
        %272 = vadd.xlane.f32.xlu0 %v271
        %v273 = vpop.xlane.xlu0 %272
        %v274 = vsel %vm267, %v250, 0.0
        %275 = vadd.xlane.f32.xlu0 %v274
        %v276 = vpop.xlane.xlu0 %275
        %v277 = vsel %vm267, %v251, 0.0
        %278 = vadd.xlane.f32.xlu0 %v277
        %v279 = vpop.xlane.xlu0 %278
        %v280 = vsel %vm267, %v252, 0.0
        %281 = vadd.xlane.f32.xlu0 %v280
        %v282 = vpop.xlane.xlu0 %281
        %v283 = vsel %vm267, %v253, 0.0
        %284 = vadd.xlane.f32.xlu0 %v283
        %v285 = vpop.xlane.xlu0 %284
        %v286 = vsel %vm267, %v254, 0.0
        %287 = vadd.xlane.f32.xlu0 %v286
        %v288 = vpop.xlane.xlu0 %287
        %v289 = vsel %vm267, %v255, 0.0
        %290 = vadd.xlane.f32.xlu0 %v289
        %v291 = vpop.xlane.xlu0 %290
        %v292 = vsel %vm267, %v256, 0.0
        %293 = vadd.xlane.f32.xlu0 %v292
        %v294 = vpop.xlane.xlu0 %293
        %v295 = vsel %vm267, %v257, 0.0
        %296 = vadd.xlane.f32.xlu0 %v295
        %v297 = vpop.xlane.xlu0 %296
        %v298 = vsel %vm267, %v258, 0.0
        %299 = vadd.xlane.f32.xlu0 %v298
        %v300 = vpop.xlane.xlu0 %299
        %v301 = vsel %vm267, %v259, 0.0
        %302 = vadd.xlane.f32.xlu0 %v301
        %v303 = vpop.xlane.xlu0 %302
        %v304 = vsel %vm267, %v260, 0.0
        %305 = vadd.xlane.f32.xlu0 %v304
        %v306 = vpop.xlane.xlu0 %305
        %v307 = vsel %vm267, %v261, 0.0
        %308 = vadd.xlane.f32.xlu0 %v307
        %v309 = vpop.xlane.xlu0 %308
        %v310 = vsel %vm267, %v262, 0.0
        %311 = vadd.xlane.f32.xlu0 %v310
        %v312 = vpop.xlane.xlu0 %311
        %v313 = vsel %vm267, %v263, 0.0
        %314 = vadd.xlane.f32.xlu0 %v313
        %v315 = vpop.xlane.xlu0 %314
        %v316 = vsel %vm267, %v264, 0.0
        %317 = vadd.xlane.f32.xlu0 %v316
        %v318 = vpop.xlane.xlu0 %317
        %v319 = vsel %vm267, %v265, 0.0
        %320 = vadd.xlane.f32.xlu0 %v319
        %v321 = vpop.xlane.xlu0 %320
        %v322 = vsel %vm267, %v266, 0.0
        %323 = vadd.xlane.f32.xlu0 %v322
        %v324 = vpop.xlane.xlu0 %323
        %v325 = vld [vmem:[%s209] sm:$0x3]
        %v327 = vperm.slane %v325, 0
        %v328 = vperm.slane %v325, 1
        %v329 = vlaneseq
        %v330 = vshrl.u32 %v329, 7
        %332 = vset.pattern.permute.xlu0 %v330
        %333 = vperm.xlu0 %332, %v327
        %v334 = vpop.permute.xlu0 %333
        %v335 = vlaneseq
        %v336 = vshrl.u32 %v335, 7
        %v337 = vadd.s32 %v336, 8
        %338 = vset.pattern.permute.xlu0 %v337
        %339 = vperm.xlu0 %338, %v327
        %v340 = vpop.permute.xlu0 %339
        %v341 = vlaneseq
        %v342 = vshrl.u32 %v341, 7
        %v343 = vadd.s32 %v342, 16
        %344 = vset.pattern.permute.xlu0 %v343
        %345 = vperm.xlu0 %344, %v327
        %v346 = vpop.permute.xlu0 %345
        %v347 = vlaneseq
        %v348 = vshrl.u32 %v347, 7
        %v349 = vadd.s32 %v348, 24
        %350 = vset.pattern.permute.xlu0 %v349
        %351 = vperm.xlu0 %350, %v327
        %v352 = vpop.permute.xlu0 %351
        %v353 = vlaneseq
        %v354 = vshrl.u32 %v353, 7
        %v355 = vadd.s32 %v354, 32
        %356 = vset.pattern.permute.xlu0 %v355
        %357 = vperm.xlu0 %356, %v327
        %v358 = vpop.permute.xlu0 %357
        %v359 = vlaneseq
        %v360 = vshrl.u32 %v359, 7
        %v361 = vadd.s32 %v360, 40
        %362 = vset.pattern.permute.xlu0 %v361
        %363 = vperm.xlu0 %362, %v327
        %v364 = vpop.permute.xlu0 %363
        %v365 = vlaneseq
        %v366 = vshrl.u32 %v365, 7
        %v367 = vadd.s32 %v366, 48
        %368 = vset.pattern.permute.xlu0 %v367
        %369 = vperm.xlu0 %368, %v327
        %v370 = vpop.permute.xlu0 %369
        %v371 = vlaneseq
        %v372 = vshrl.u32 %v371, 7
        %v373 = vadd.s32 %v372, 56
        %374 = vset.pattern.permute.xlu0 %v373
        %375 = vperm.xlu0 %374, %v327
        %v376 = vpop.permute.xlu0 %375
        %v377 = vlaneseq
        %v378 = vshrl.u32 %v377, 7
        %v379 = vadd.s32 %v378, 64
        %380 = vset.pattern.permute.xlu0 %v379
        %381 = vperm.xlu0 %380, %v327
        %v382 = vpop.permute.xlu0 %381
        %v383 = vlaneseq
        %v384 = vshrl.u32 %v383, 7
        %v385 = vadd.s32 %v384, 72
        %386 = vset.pattern.permute.xlu0 %v385
        %387 = vperm.xlu0 %386, %v327
        %v388 = vpop.permute.xlu0 %387
        %v389 = vlaneseq
        %v390 = vshrl.u32 %v389, 7
        %v391 = vadd.s32 %v390, 80
        %392 = vset.pattern.permute.xlu0 %v391
        %393 = vperm.xlu0 %392, %v327
        %v394 = vpop.permute.xlu0 %393
        %v395 = vlaneseq
        %v396 = vshrl.u32 %v395, 7
        %v397 = vadd.s32 %v396, 88
        %398 = vset.pattern.permute.xlu0 %v397
        %399 = vperm.xlu0 %398, %v327
        %v400 = vpop.permute.xlu0 %399
        %v401 = vlaneseq
        %v402 = vshrl.u32 %v401, 7
        %v403 = vadd.s32 %v402, 96
        %404 = vset.pattern.permute.xlu0 %v403
        %405 = vperm.xlu0 %404, %v327
        %v406 = vpop.permute.xlu0 %405
        %v407 = vlaneseq
        %v408 = vshrl.u32 %v407, 7
        %v409 = vadd.s32 %v408, 104
        %410 = vset.pattern.permute.xlu0 %v409
        %411 = vperm.xlu0 %410, %v327
        %v412 = vpop.permute.xlu0 %411
        %v413 = vlaneseq
        %v414 = vshrl.u32 %v413, 7
        %v415 = vadd.s32 %v414, 112
        %416 = vset.pattern.permute.xlu0 %v415
        %417 = vperm.xlu0 %416, %v327
        %v418 = vpop.permute.xlu0 %417
        %v419 = vlaneseq
        %v420 = vshrl.u32 %v419, 7
        %v421 = vadd.s32 %v420, 120
        %422 = vset.pattern.permute.xlu0 %v421
        %423 = vperm.xlu0 %422, %v327
        %v424 = vpop.permute.xlu0 %423
        %v425 = vlaneseq
        %v426 = vshrl.u32 %v425, 7
        %428 = vset.pattern.permute.xlu0 %v426
        %429 = vperm.xlu0 %428, %v328
        %v430 = vpop.permute.xlu0 %429
        %v431 = vlaneseq
        %v432 = vshrl.u32 %v431, 7
        %v433 = vadd.s32 %v432, 8
        %434 = vset.pattern.permute.xlu0 %v433
        %435 = vperm.xlu0 %434, %v328
        %v436 = vpop.permute.xlu0 %435
        %v437 = vlaneseq
        %v438 = vshrl.u32 %v437, 7
        %v439 = vadd.s32 %v438, 16
        %440 = vset.pattern.permute.xlu0 %v439
        %441 = vperm.xlu0 %440, %v328
        %v442 = vpop.permute.xlu0 %441
        %v462 = vadd.f32 %v270, %v334
        %v463 = vadd.f32 %v273, %v340
        %v464 = vadd.f32 %v276, %v346
        %v465 = vadd.f32 %v279, %v352
        %v466 = vadd.f32 %v282, %v358
        %v467 = vadd.f32 %v285, %v364
        %v468 = vadd.f32 %v288, %v370
        %v469 = vadd.f32 %v291, %v376
        %v470 = vadd.f32 %v294, %v382
        %v471 = vadd.f32 %v297, %v388
        %v472 = vadd.f32 %v300, %v394
        %v473 = vadd.f32 %v303, %v400
        %v474 = vadd.f32 %v306, %v406
        %v475 = vadd.f32 %v309, %v412
        %v476 = vadd.f32 %v312, %v418
        %v477 = vadd.f32 %v315, %v424
        %v478 = vadd.f32 %v318, %v430
        %v479 = vadd.f32 %v321, %v436
        %v480 = vadd.f32 %v324, %v442
        %v500 = vrot.slane %v462, 1
        %v501 = vrot.slane %v462, 2
        %v502 = vrot.slane %v462, 3
        %v503 = vrot.slane %v462, 4
        %v504 = vrot.slane %v462, 5
        %v505 = vrot.slane %v462, 6
        %v506 = vrot.slane %v462, 7
        %v507 = vrot.slane %v463, 1
        %v508 = vrot.slane %v463, 2
        %v509 = vrot.slane %v463, 3
        %v510 = vrot.slane %v463, 4
        %v511 = vrot.slane %v463, 5
        %v512 = vrot.slane %v463, 6
        %v513 = vrot.slane %v463, 7
        %v514 = vrot.slane %v464, 1
        %v515 = vrot.slane %v464, 2
        %v516 = vrot.slane %v464, 3
        %v517 = vrot.slane %v464, 4
        %v518 = vrot.slane %v464, 5
        %v519 = vrot.slane %v464, 6
        %v520 = vrot.slane %v464, 7
        %v521 = vrot.slane %v465, 1
        %v522 = vrot.slane %v465, 2
        %v523 = vrot.slane %v465, 3
        %v524 = vrot.slane %v465, 4
        %v525 = vrot.slane %v465, 5
        %v526 = vrot.slane %v465, 6
        %v527 = vrot.slane %v465, 7
        %v528 = vrot.slane %v466, 1
        %v529 = vrot.slane %v466, 2
        %v530 = vrot.slane %v466, 3
        %v531 = vrot.slane %v466, 4
        %v532 = vrot.slane %v466, 5
        %v533 = vrot.slane %v466, 6
        %v534 = vrot.slane %v466, 7
        %v535 = vrot.slane %v467, 1
        %v536 = vrot.slane %v467, 2
        %v537 = vrot.slane %v467, 3
        %v538 = vrot.slane %v467, 4
        %v539 = vrot.slane %v467, 5
        %v540 = vrot.slane %v467, 6
        %v541 = vrot.slane %v467, 7
        %v542 = vrot.slane %v468, 1
        %v543 = vrot.slane %v468, 2
        %v544 = vrot.slane %v468, 3
        %v545 = vrot.slane %v468, 4
        %v546 = vrot.slane %v468, 5
        %v547 = vrot.slane %v468, 6
        %v548 = vrot.slane %v468, 7
        %v549 = vrot.slane %v469, 1
        %v550 = vrot.slane %v469, 2
        %v551 = vrot.slane %v469, 3
        %v552 = vrot.slane %v469, 4
        %v553 = vrot.slane %v469, 5
        %v554 = vrot.slane %v469, 6
        %v555 = vrot.slane %v469, 7
        %v556 = vrot.slane %v470, 1
        %v557 = vrot.slane %v470, 2
        %v558 = vrot.slane %v470, 3
        %v559 = vrot.slane %v470, 4
        %v560 = vrot.slane %v470, 5
        %v561 = vrot.slane %v470, 6
        %v562 = vrot.slane %v470, 7
        %v563 = vrot.slane %v471, 1
        %v564 = vrot.slane %v471, 2
        %v565 = vrot.slane %v471, 3
        %v566 = vrot.slane %v471, 4
        %v567 = vrot.slane %v471, 5
        %v568 = vrot.slane %v471, 6
        %v569 = vrot.slane %v471, 7
        %v570 = vrot.slane %v472, 1
        %v571 = vrot.slane %v472, 2
        %v572 = vrot.slane %v472, 3
        %v573 = vrot.slane %v472, 4
        %v574 = vrot.slane %v472, 5
        %v575 = vrot.slane %v472, 6
        %v576 = vrot.slane %v472, 7
        %v577 = vrot.slane %v473, 1
        %v578 = vrot.slane %v473, 2
        %v579 = vrot.slane %v473, 3
        %v580 = vrot.slane %v473, 4
        %v581 = vrot.slane %v473, 5
        %v582 = vrot.slane %v473, 6
        %v583 = vrot.slane %v473, 7
        %v584 = vrot.slane %v474, 1
        %v585 = vrot.slane %v474, 2
        %v586 = vrot.slane %v474, 3
        %v587 = vrot.slane %v474, 4
        %v588 = vrot.slane %v474, 5
        %v589 = vrot.slane %v474, 6
        %v590 = vrot.slane %v474, 7
        %v591 = vrot.slane %v475, 1
        %v592 = vrot.slane %v475, 2
        %v593 = vrot.slane %v475, 3
        %v594 = vrot.slane %v475, 4
        %v595 = vrot.slane %v475, 5
        %v596 = vrot.slane %v475, 6
        %v597 = vrot.slane %v475, 7
        %v598 = vrot.slane %v476, 1
        %v599 = vrot.slane %v476, 2
        %v600 = vrot.slane %v476, 3
        %v601 = vrot.slane %v476, 4
        %v602 = vrot.slane %v476, 5
        %v603 = vrot.slane %v476, 6
        %v604 = vrot.slane %v476, 7
        %v605 = vrot.slane %v477, 1
        %v606 = vrot.slane %v477, 2
        %v607 = vrot.slane %v477, 3
        %v608 = vrot.slane %v477, 4
        %v609 = vrot.slane %v477, 5
        %v610 = vrot.slane %v477, 6
        %v611 = vrot.slane %v477, 7
        %v612 = vrot.slane %v478, 1
        %v613 = vrot.slane %v478, 2
        %v614 = vrot.slane %v478, 3
        %v615 = vrot.slane %v478, 4
        %v616 = vrot.slane %v478, 5
        %v617 = vrot.slane %v478, 6
        %v618 = vrot.slane %v478, 7
        %v619 = vrot.slane %v479, 1
        %v620 = vrot.slane %v479, 2
        %v621 = vrot.slane %v479, 3
        %v622 = vrot.slane %v479, 4
        %v623 = vrot.slane %v479, 5
        %v624 = vrot.slane %v479, 6
        %v625 = vrot.slane %v479, 7
        %v626 = vrot.slane %v480, 1
        %v627 = vrot.slane %v480, 2
        %v628 = vrot.slane %v480, 3
        %v629 = vrot.slane %v480, 4
        %v630 = vrot.slane %v480, 5
        %v631 = vrot.slane %v480, 6
        %v632 = vrot.slane %v480, 7
        %633 = vst [vmem:[#allocation1] ss:$9 sm:$0xff] %v462
        %s634 = scalar_lea.vmem [#allocation1], 1
        %635 = vst [vmem:[%s634] ss:$9 sm:$0xff] %v500
        %s636 = scalar_lea.vmem [#allocation1], 2
        %637 = vst [vmem:[%s636] ss:$9 sm:$0xff] %v501
        %s638 = scalar_lea.vmem [#allocation1], 3
        %639 = vst [vmem:[%s638] ss:$9 sm:$0xff] %v502
        %s640 = scalar_lea.vmem [#allocation1], 4
        %641 = vst [vmem:[%s640] ss:$9 sm:$0xff] %v503
        %s642 = scalar_lea.vmem [#allocation1], 5
        %643 = vst [vmem:[%s642] ss:$9 sm:$0xff] %v504
        %s644 = scalar_lea.vmem [#allocation1], 6
        %645 = vst [vmem:[%s644] ss:$9 sm:$0xff] %v505
        %s646 = scalar_lea.vmem [#allocation1], 7
        %647 = vst [vmem:[%s646] ss:$9 sm:$0xff] %v506
        %v648 = vld [vmem:[#allocation1] sm:$0xff]
        %649 = vst [vmem:[#allocation1] ss:$9 sm:$0xff] %v463
        %650 = vst [vmem:[%s634] ss:$9 sm:$0xff] %v507
        %651 = vst [vmem:[%s636] ss:$9 sm:$0xff] %v508
        %652 = vst [vmem:[%s638] ss:$9 sm:$0xff] %v509
        %653 = vst [vmem:[%s640] ss:$9 sm:$0xff] %v510
        %654 = vst [vmem:[%s642] ss:$9 sm:$0xff] %v511
        %655 = vst [vmem:[%s644] ss:$9 sm:$0xff] %v512
        %656 = vst [vmem:[%s646] ss:$9 sm:$0xff] %v513
        %v657 = vld [vmem:[#allocation1] sm:$0xff]
        %658 = vst [vmem:[#allocation1] ss:$9 sm:$0xff] %v464
        %659 = vst [vmem:[%s634] ss:$9 sm:$0xff] %v514
        %660 = vst [vmem:[%s636] ss:$9 sm:$0xff] %v515
        %661 = vst [vmem:[%s638] ss:$9 sm:$0xff] %v516
        %662 = vst [vmem:[%s640] ss:$9 sm:$0xff] %v517
        %663 = vst [vmem:[%s642] ss:$9 sm:$0xff] %v518
        %664 = vst [vmem:[%s644] ss:$9 sm:$0xff] %v519
        %665 = vst [vmem:[%s646] ss:$9 sm:$0xff] %v520
        %v666 = vld [vmem:[#allocation1] sm:$0xff]
        %667 = vst [vmem:[#allocation1] ss:$9 sm:$0xff] %v465
        %668 = vst [vmem:[%s634] ss:$9 sm:$0xff] %v521
        %669 = vst [vmem:[%s636] ss:$9 sm:$0xff] %v522
        %670 = vst [vmem:[%s638] ss:$9 sm:$0xff] %v523
        %671 = vst [vmem:[%s640] ss:$9 sm:$0xff] %v524
        %672 = vst [vmem:[%s642] ss:$9 sm:$0xff] %v525
        %673 = vst [vmem:[%s644] ss:$9 sm:$0xff] %v526
        %674 = vst [vmem:[%s646] ss:$9 sm:$0xff] %v527
        %v675 = vld [vmem:[#allocation1] sm:$0xff]
        %676 = vst [vmem:[#allocation1] ss:$9 sm:$0xff] %v466
        %677 = vst [vmem:[%s634] ss:$9 sm:$0xff] %v528
        %678 = vst [vmem:[%s636] ss:$9 sm:$0xff] %v529
        %679 = vst [vmem:[%s638] ss:$9 sm:$0xff] %v530
        %680 = vst [vmem:[%s640] ss:$9 sm:$0xff] %v531
        %681 = vst [vmem:[%s642] ss:$9 sm:$0xff] %v532
        %682 = vst [vmem:[%s644] ss:$9 sm:$0xff] %v533
        %683 = vst [vmem:[%s646] ss:$9 sm:$0xff] %v534
        %v684 = vld [vmem:[#allocation1] sm:$0xff]
        %685 = vst [vmem:[#allocation1] ss:$9 sm:$0xff] %v467
        %686 = vst [vmem:[%s634] ss:$9 sm:$0xff] %v535
        %687 = vst [vmem:[%s636] ss:$9 sm:$0xff] %v536
        %688 = vst [vmem:[%s638] ss:$9 sm:$0xff] %v537
        %689 = vst [vmem:[%s640] ss:$9 sm:$0xff] %v538
        %690 = vst [vmem:[%s642] ss:$9 sm:$0xff] %v539
        %691 = vst [vmem:[%s644] ss:$9 sm:$0xff] %v540
        %692 = vst [vmem:[%s646] ss:$9 sm:$0xff] %v541
        %v693 = vld [vmem:[#allocation1] sm:$0xff]
        %694 = vst [vmem:[#allocation1] ss:$9 sm:$0xff] %v468
        %695 = vst [vmem:[%s634] ss:$9 sm:$0xff] %v542
        %696 = vst [vmem:[%s636] ss:$9 sm:$0xff] %v543
        %697 = vst [vmem:[%s638] ss:$9 sm:$0xff] %v544
        %698 = vst [vmem:[%s640] ss:$9 sm:$0xff] %v545
        %699 = vst [vmem:[%s642] ss:$9 sm:$0xff] %v546
        %700 = vst [vmem:[%s644] ss:$9 sm:$0xff] %v547
        %701 = vst [vmem:[%s646] ss:$9 sm:$0xff] %v548
        %v702 = vld [vmem:[#allocation1] sm:$0xff]
        %703 = vst [vmem:[#allocation1] ss:$9 sm:$0xff] %v469
        %704 = vst [vmem:[%s634] ss:$9 sm:$0xff] %v549
        %705 = vst [vmem:[%s636] ss:$9 sm:$0xff] %v550
        %706 = vst [vmem:[%s638] ss:$9 sm:$0xff] %v551
        %707 = vst [vmem:[%s640] ss:$9 sm:$0xff] %v552
        %708 = vst [vmem:[%s642] ss:$9 sm:$0xff] %v553
        %709 = vst [vmem:[%s644] ss:$9 sm:$0xff] %v554
        %710 = vst [vmem:[%s646] ss:$9 sm:$0xff] %v555
        %v711 = vld [vmem:[#allocation1] sm:$0xff]
        %712 = vst [vmem:[#allocation1] ss:$9 sm:$0xff] %v470
        %713 = vst [vmem:[%s634] ss:$9 sm:$0xff] %v556
        %714 = vst [vmem:[%s636] ss:$9 sm:$0xff] %v557
        %715 = vst [vmem:[%s638] ss:$9 sm:$0xff] %v558
        %716 = vst [vmem:[%s640] ss:$9 sm:$0xff] %v559
        %717 = vst [vmem:[%s642] ss:$9 sm:$0xff] %v560
        %718 = vst [vmem:[%s644] ss:$9 sm:$0xff] %v561
        %719 = vst [vmem:[%s646] ss:$9 sm:$0xff] %v562
        %v720 = vld [vmem:[#allocation1] sm:$0xff]
        %721 = vst [vmem:[#allocation1] ss:$9 sm:$0xff] %v471
        %722 = vst [vmem:[%s634] ss:$9 sm:$0xff] %v563
        %723 = vst [vmem:[%s636] ss:$9 sm:$0xff] %v564
        %724 = vst [vmem:[%s638] ss:$9 sm:$0xff] %v565
        %725 = vst [vmem:[%s640] ss:$9 sm:$0xff] %v566
        %726 = vst [vmem:[%s642] ss:$9 sm:$0xff] %v567
        %727 = vst [vmem:[%s644] ss:$9 sm:$0xff] %v568
        %728 = vst [vmem:[%s646] ss:$9 sm:$0xff] %v569
        %v729 = vld [vmem:[#allocation1] sm:$0xff]
        %730 = vst [vmem:[#allocation1] ss:$9 sm:$0xff] %v472
        %731 = vst [vmem:[%s634] ss:$9 sm:$0xff] %v570
        %732 = vst [vmem:[%s636] ss:$9 sm:$0xff] %v571
        %733 = vst [vmem:[%s638] ss:$9 sm:$0xff] %v572
        %734 = vst [vmem:[%s640] ss:$9 sm:$0xff] %v573
        %735 = vst [vmem:[%s642] ss:$9 sm:$0xff] %v574
        %736 = vst [vmem:[%s644] ss:$9 sm:$0xff] %v575
        %737 = vst [vmem:[%s646] ss:$9 sm:$0xff] %v576
        %v738 = vld [vmem:[#allocation1] sm:$0xff]
        %739 = vst [vmem:[#allocation1] ss:$9 sm:$0xff] %v473
        %740 = vst [vmem:[%s634] ss:$9 sm:$0xff] %v577
        %741 = vst [vmem:[%s636] ss:$9 sm:$0xff] %v578
        %742 = vst [vmem:[%s638] ss:$9 sm:$0xff] %v579
        %743 = vst [vmem:[%s640] ss:$9 sm:$0xff] %v580
        %744 = vst [vmem:[%s642] ss:$9 sm:$0xff] %v581
        %745 = vst [vmem:[%s644] ss:$9 sm:$0xff] %v582
        %746 = vst [vmem:[%s646] ss:$9 sm:$0xff] %v583
        %v747 = vld [vmem:[#allocation1] sm:$0xff]
        %748 = vst [vmem:[#allocation1] ss:$9 sm:$0xff] %v474
        %749 = vst [vmem:[%s634] ss:$9 sm:$0xff] %v584
        %750 = vst [vmem:[%s636] ss:$9 sm:$0xff] %v585
        %751 = vst [vmem:[%s638] ss:$9 sm:$0xff] %v586
        %752 = vst [vmem:[%s640] ss:$9 sm:$0xff] %v587
        %753 = vst [vmem:[%s642] ss:$9 sm:$0xff] %v588
        %754 = vst [vmem:[%s644] ss:$9 sm:$0xff] %v589
        %755 = vst [vmem:[%s646] ss:$9 sm:$0xff] %v590
        %v756 = vld [vmem:[#allocation1] sm:$0xff]
        %757 = vst [vmem:[#allocation1] ss:$9 sm:$0xff] %v475
        %758 = vst [vmem:[%s634] ss:$9 sm:$0xff] %v591
        %759 = vst [vmem:[%s636] ss:$9 sm:$0xff] %v592
        %760 = vst [vmem:[%s638] ss:$9 sm:$0xff] %v593
        %761 = vst [vmem:[%s640] ss:$9 sm:$0xff] %v594
        %762 = vst [vmem:[%s642] ss:$9 sm:$0xff] %v595
        %763 = vst [vmem:[%s644] ss:$9 sm:$0xff] %v596
        %764 = vst [vmem:[%s646] ss:$9 sm:$0xff] %v597
        %v765 = vld [vmem:[#allocation1] sm:$0xff]
        %766 = vst [vmem:[#allocation1] ss:$9 sm:$0xff] %v476
        %767 = vst [vmem:[%s634] ss:$9 sm:$0xff] %v598
        %768 = vst [vmem:[%s636] ss:$9 sm:$0xff] %v599
        %769 = vst [vmem:[%s638] ss:$9 sm:$0xff] %v600
        %770 = vst [vmem:[%s640] ss:$9 sm:$0xff] %v601
        %771 = vst [vmem:[%s642] ss:$9 sm:$0xff] %v602
        %772 = vst [vmem:[%s644] ss:$9 sm:$0xff] %v603
        %773 = vst [vmem:[%s646] ss:$9 sm:$0xff] %v604
        %v774 = vld [vmem:[#allocation1] sm:$0xff]
        %775 = vst [vmem:[#allocation1] ss:$9 sm:$0xff] %v477
        %776 = vst [vmem:[%s634] ss:$9 sm:$0xff] %v605
        %777 = vst [vmem:[%s636] ss:$9 sm:$0xff] %v606
        %778 = vst [vmem:[%s638] ss:$9 sm:$0xff] %v607
        %779 = vst [vmem:[%s640] ss:$9 sm:$0xff] %v608
        %780 = vst [vmem:[%s642] ss:$9 sm:$0xff] %v609
        %781 = vst [vmem:[%s644] ss:$9 sm:$0xff] %v610
        %782 = vst [vmem:[%s646] ss:$9 sm:$0xff] %v611
        %v783 = vld [vmem:[#allocation1] sm:$0xff]
        %784 = vst [vmem:[#allocation1] ss:$9 sm:$0xff] %v478
        %785 = vst [vmem:[%s634] ss:$9 sm:$0xff] %v612
        %786 = vst [vmem:[%s636] ss:$9 sm:$0xff] %v613
        %787 = vst [vmem:[%s638] ss:$9 sm:$0xff] %v614
        %788 = vst [vmem:[%s640] ss:$9 sm:$0xff] %v615
        %789 = vst [vmem:[%s642] ss:$9 sm:$0xff] %v616
        %790 = vst [vmem:[%s644] ss:$9 sm:$0xff] %v617
        %791 = vst [vmem:[%s646] ss:$9 sm:$0xff] %v618
        %v792 = vld [vmem:[#allocation1] sm:$0xff]
        %793 = vst [vmem:[#allocation1] ss:$9 sm:$0xff] %v479
        %794 = vst [vmem:[%s634] ss:$9 sm:$0xff] %v619
        %795 = vst [vmem:[%s636] ss:$9 sm:$0xff] %v620
        %796 = vst [vmem:[%s638] ss:$9 sm:$0xff] %v621
        %797 = vst [vmem:[%s640] ss:$9 sm:$0xff] %v622
        %798 = vst [vmem:[%s642] ss:$9 sm:$0xff] %v623
        %799 = vst [vmem:[%s644] ss:$9 sm:$0xff] %v624
        %800 = vst [vmem:[%s646] ss:$9 sm:$0xff] %v625
        %v801 = vld [vmem:[#allocation1] sm:$0xff]
        %802 = vst [vmem:[#allocation1] ss:$9 sm:$0xff] %v480
        %803 = vst [vmem:[%s634] ss:$9 sm:$0xff] %v626
        %804 = vst [vmem:[%s636] ss:$9 sm:$0xff] %v627
        %805 = vst [vmem:[%s638] ss:$9 sm:$0xff] %v628
        %806 = vst [vmem:[%s640] ss:$9 sm:$0xff] %v629
        %807 = vst [vmem:[%s642] ss:$9 sm:$0xff] %v630
        %808 = vst [vmem:[%s644] ss:$9 sm:$0xff] %v631
        %809 = vst [vmem:[%s646] ss:$9 sm:$0xff] %v632
        %v810 = vld [vmem:[#allocation1] sm:$0xff]
        %811 = vset.pattern.permute.xlu0 0
        %812 = vperm.xlu0 %811, %v648
        %v813 = vpop.permute.xlu0 %812
        %814 = vset.pattern.permute.xlu0 0
        %815 = vperm.xlu0 %814, %v657
        %v816 = vpop.permute.xlu0 %815
        %817 = vset.pattern.permute.xlu0 0
        %818 = vperm.xlu0 %817, %v666
        %v819 = vpop.permute.xlu0 %818
        %820 = vset.pattern.permute.xlu0 0
        %821 = vperm.xlu0 %820, %v675
        %v822 = vpop.permute.xlu0 %821
        %823 = vset.pattern.permute.xlu0 0
        %824 = vperm.xlu0 %823, %v684
        %v825 = vpop.permute.xlu0 %824
        %826 = vset.pattern.permute.xlu0 0
        %827 = vperm.xlu0 %826, %v693
        %v828 = vpop.permute.xlu0 %827
        %829 = vset.pattern.permute.xlu0 0
        %830 = vperm.xlu0 %829, %v702
        %v831 = vpop.permute.xlu0 %830
        %832 = vset.pattern.permute.xlu0 0
        %833 = vperm.xlu0 %832, %v711
        %v834 = vpop.permute.xlu0 %833
        %835 = vset.pattern.permute.xlu0 0
        %836 = vperm.xlu0 %835, %v720
        %v837 = vpop.permute.xlu0 %836
        %838 = vset.pattern.permute.xlu0 0
        %839 = vperm.xlu0 %838, %v729
        %v840 = vpop.permute.xlu0 %839
        %841 = vset.pattern.permute.xlu0 0
        %842 = vperm.xlu0 %841, %v738
        %v843 = vpop.permute.xlu0 %842
        %844 = vset.pattern.permute.xlu0 0
        %845 = vperm.xlu0 %844, %v747
        %v846 = vpop.permute.xlu0 %845
        %847 = vset.pattern.permute.xlu0 0
        %848 = vperm.xlu0 %847, %v756
        %v849 = vpop.permute.xlu0 %848
        %850 = vset.pattern.permute.xlu0 0
        %851 = vperm.xlu0 %850, %v765
        %v852 = vpop.permute.xlu0 %851
        %853 = vset.pattern.permute.xlu0 0
        %854 = vperm.xlu0 %853, %v774
        %v855 = vpop.permute.xlu0 %854
        %856 = vset.pattern.permute.xlu0 0
        %857 = vperm.xlu0 %856, %v783
        %v858 = vpop.permute.xlu0 %857
        %859 = vset.pattern.permute.xlu0 0
        %860 = vperm.xlu0 %859, %v792
        %v861 = vpop.permute.xlu0 %860
        %862 = vset.pattern.permute.xlu0 0
        %863 = vperm.xlu0 %862, %v801
        %v864 = vpop.permute.xlu0 %863
        %865 = vset.pattern.permute.xlu0 0
        %866 = vperm.xlu0 %865, %v810
        %v867 = vpop.permute.xlu0 %866
        %v868 = vlaneseq
        %v869 = vand.u32 %v868, 127
        %v870 = vperm.slane %v813, %v869
        %v871 = vadd.s32 %v869, 4294967288
        %v872 = vperm.slane %v816, %v871
        %vm873 = vcmask 130112
        %v874 = vsel %vm873, %v872, %v870
        %v875 = vadd.s32 %v869, 4294967280
        %v876 = vperm.slane %v819, %v875
        %vm877 = vcmask 195712
        %v878 = vsel %vm877, %v876, %v874
        %v879 = vadd.s32 %v869, 4294967272
        %v880 = vperm.slane %v822, %v879
        %vm881 = vcmask 261312
        %v882 = vsel %vm881, %v880, %v878
        %v883 = vadd.s32 %v869, 4294967264
        %v884 = vperm.slane %v825, %v883
        %vm885 = vcmask 326912
        %v886 = vsel %vm885, %v884, %v882
        %v887 = vadd.s32 %v869, 4294967256
        %v888 = vperm.slane %v828, %v887
        %vm889 = vcmask 392512
        %v890 = vsel %vm889, %v888, %v886
        %v891 = vadd.s32 %v869, 4294967248
        %v892 = vperm.slane %v831, %v891
        %vm893 = vcmask 458112
        %v894 = vsel %vm893, %v892, %v890
        %v895 = vadd.s32 %v869, 4294967240
        %v896 = vperm.slane %v834, %v895
        %vm897 = vcmask 523712
        %v898 = vsel %vm897, %v896, %v894
        %v899 = vadd.s32 %v869, 4294967232
        %v900 = vperm.slane %v837, %v899
        %vm901 = vcmask 589312
        %v902 = vsel %vm901, %v900, %v898
        %v903 = vadd.s32 %v869, 4294967224
        %v904 = vperm.slane %v840, %v903
        %vm905 = vcmask 654912
        %v906 = vsel %vm905, %v904, %v902
        %v907 = vadd.s32 %v869, 4294967216
        %v908 = vperm.slane %v843, %v907
        %vm909 = vcmask 720512
        %v910 = vsel %vm909, %v908, %v906
        %v911 = vadd.s32 %v869, 4294967208
        %v912 = vperm.slane %v846, %v911
        %vm913 = vcmask 786112
        %v914 = vsel %vm913, %v912, %v910
        %v915 = vadd.s32 %v869, 4294967200
        %v916 = vperm.slane %v849, %v915
        %vm917 = vcmask 851712
        %v918 = vsel %vm917, %v916, %v914
        %v919 = vadd.s32 %v869, 4294967192
        %v920 = vperm.slane %v852, %v919
        %vm921 = vcmask 917312
        %v922 = vsel %vm921, %v920, %v918
        %v923 = vadd.s32 %v869, 4294967184
        %v924 = vperm.slane %v855, %v923
        %vm925 = vcmask 982912
        %v926 = vsel %vm925, %v924, %v922
        %v927 = vadd.s32 %v869, 4294967176
        %v928 = vperm.slane %v858, %v927
        %vm929 = vcmask 1048512
        %v930 = vsel %vm929, %v928, %v926
        %v931 = vperm.slane %v861, %v869
        %v932 = vperm.slane %v864, %v871
        %v933 = vsel %vm873, %v932, %v931
        %v934 = vperm.slane %v867, %v875
        %v935 = vsel %vm877, %v934, %v933
        %v936 = vrot.slane %v935, 7
        %vm937 = vcmask 1040384
        %v938 = vsel %vm937, %v930, %v936
        %v940 = vlaneseq
        %vm941 = vcmp.ge.s32.totalorder %v940, 0
        %vm942 = vcmp.lt.s32.totalorder %v940, 152
        %vm943 = vmand %vm941, %vm942
        %944 = vst.msk [vmem:[%s193] sm:$0x3] %vm943, %v938
        %s945 = sand.u32 %s103, 1
        %s946 = scalar_lea.sflag [#allocation3], %s945
        %s947 = sand.u32 %s103, 1
        %s948 = smul.addr %s947, 2
        %s949 = scalar_lea.vmem [#allocation2], %s948
        // Predicated region
        $region33: #{tpu_custom_call.1} parent=31 // pred_check
          %p950 = pneg %p113
        $region34: #{tpu_custom_call.1} parent=31 // pred_check_branch
          %952 = sbr.rel (%p950) target = $region36
        $region35: #{tpu_custom_call.1} parent=31 // pred_region
          %954 = vsyncadd %s946, 0
          %s955 = smul.addr %s17, 2
          %s956 = scalar_lea.hbm %s3, %s955
          %s958 = sshll.u32 %s949, 4
          %s959 = int_to_ptr.vmem [resolvable:$true] %s958
          %s960 = sshll.u32 %s956, 4
          %s961 = int_to_ptr.hbm [resolvable:$true] %s960
          %963 = dma.vmem_to_hbm [thread:$0]  %s959, 32, %s961, %s946
        $region36: #{tpu_custom_call.1} parent=31 // pred_fallthru
          _
      $region32: #{tpu_custom_call.1} parent=5 // pred_fallthru
        _
      %p964 = scmp.le.s32.totalorder 2, %s12
      // Predicated region
      $region37: #{tpu_custom_call.1} parent=5 // pred_check
        %p965 = pneg %p964
      $region38: #{tpu_custom_call.1} parent=5 // pred_check_branch
        %967 = sbr.rel (%p965) target = $region40
      $region39: #{tpu_custom_call.1} parent=5 // pred_region
        %s968 = ssub.s32 %s12, 2
        // Predicated region
        $region41: #{tpu_custom_call.1} parent=39 // pred_check
          %p969 = pneg %p119
        $region42: #{tpu_custom_call.1} parent=39 // pred_check_branch
          %971 = sbr.rel (%p969) target = $region44
        $region43: #{tpu_custom_call.1} parent=39 // pred_region
          %s972 = sand.u32 %s104, 1
          %s973 = scalar_lea.sflag [#allocation3], %s972
          %s974 = sand.u32 %s104, 1
          %s975 = smul.addr %s974, 2
          %s976 = scalar_lea.vmem [#allocation2], %s975
          %978 = dma.done %s973, 32
        $region44: #{tpu_custom_call.1} parent=39 // pred_fallthru
          _
      $region40: #{tpu_custom_call.1} parent=5 // pred_fallthru
        _
    $region6: #{tpu_custom_call.1} parent=1 // loop_footer
      %s16 = sadd.s32 1, %s12
    $region7: #{tpu_custom_call.1} parent=1 // loop_footer_branch
      %11 = sbr.rel target = $region3
    $region8: #{tpu_custom_call.1} parent=1 // loop_exit
      _
    %979 = vsyncpa [#allocation3], 1
    %s980 = scalar_lea.sflag [#allocation3], 1
    %981 = vsyncpa %s980, 1

</llo_original>
